<compile_context>
chip_gen: v6e
topology: v6e:2x2x1
jax: 0.10.0
libtpu: 0.0.40
codegen_flags: <defaults>
</compile_context>

<pallas_src>
import jax
import jax.numpy as jnp
from jax.experimental import pallas as pl
from jax.experimental.pallas import tpu as pltpu


def _round_up(x, m):
    return ((x + m - 1) // m) * m


def _network_kernel(x_ref, w_ref, b_ref, cv_ref, mask_ref, o_ref):
    # Linear layer: [TB, F] x [V, F] contracted on the last dims -> [TB, V].
    # bf16 operands, f32 accumulation on the MXU (no in-kernel transpose).
    h = jax.lax.dot_general(
        x_ref[...], w_ref[...],
        dimension_numbers=(((1,), (1,)), ((), ())),
        preferred_element_type=jnp.float32,
    )
    h = h + b_ref[...]                       # bias broadcast, f32

    # Similarity logits: [TB, V] x [C_pad, V] contracted on last dims -> [TB, C_pad].
    logits = jax.lax.dot_general(
        h.astype(cv_ref.dtype), cv_ref[...],
        dimension_numbers=(((1,), (1,)), ((), ())),
        preferred_element_type=jnp.float32,
    )

    # Lane-padding classes carry an additive -inf mask (real classes get +0),
    # so they contribute exactly 0 to the softmax denominator.
    logits = logits + mask_ref[...]

    # Row-wise softmax over the class dimension, all math in f32.
    m = jnp.max(logits, axis=-1, keepdims=True)
    e = jnp.exp(logits - m)
    denom = jnp.sum(e, axis=-1, keepdims=True)
    o_ref[...] = (e / denom).astype(o_ref.dtype)   # exact divide -> rows sum to 1


def _pick_tiling(B, F_pad, V_pad, C_pad):
    """Generation-aware batch tile + VMEM limit."""
    try:
        vmem_cap = int(pltpu.get_tpu_info().vmem_capacity_bytes)
    except Exception:
        vmem_cap = 64 * 2**20  # conservative default: v7x per-TensorCore VMEM
    small_vmem = vmem_cap <= 64 * 2**20   # v7x-class part

    # Single-buffered residents: bf16 W + bf16 classVectors, f32 bias + mask.
    resident = 2 * (V_pad * F_pad + C_pad * V_pad) + 4 * (V_pad + C_pad)
    # Per-batch-row VMEM: double-buffered bf16 x row + f32 out row, plus the
    # f32 h / logits / exp temporaries of the live tile.
    per_row = 2 * (2 * F_pad + 4 * C_pad) + 4 * (V_pad + 3 * C_pad)

    budget = max(int(0.6 * vmem_cap) - resident, 8 * per_row)
    tb_cap = max(8, (budget // per_row) // 8 * 8)

    pref = 256 if small_vmem else 512     # bigger tiles on 128 MiB parts (v5e/v6e)

    if B <= 8:
        B_pad = _round_up(B, 8)
        TB = B_pad
    else:
        B_pad = _round_up(B, 16)          # bf16 sublane packing
        TB = min(pref, tb_cap, B_pad)
        TB = max(16, (TB // 16) * 16)
        # v7x has 2 TensorCores: keep at least 2 parallel grid steps when possible.
        if small_vmem and B_pad // TB < 2:
            TB = max(16, _round_up(B_pad // 2, 16))
        B_pad = _round_up(B_pad, TB)

    vmem_need = resident + TB * per_row
    vmem_limit = int(min(max(2 * vmem_need, 32 * 2**20), int(0.75 * vmem_cap)))
    vmem_limit = max(vmem_limit, min(vmem_need + (4 << 20), int(0.9 * vmem_cap)))
    return TB, B_pad, vmem_limit


def network_forward(image_features, w, b, class_vectors):
    B, F = image_features.shape
    V, Fw = w.shape
    C, Vc = class_vectors.shape
    assert F == Fw and V == Vc

    # bf16 MXU operands (f32 accumulation inside the kernel); bias/mask stay f32.
    x_bf = image_features.astype(jnp.bfloat16)
    w_bf = w.astype(jnp.bfloat16)
    cv_bf = class_vectors.astype(jnp.bfloat16)
    b2d = b.reshape(1, V).astype(jnp.float32)

    # Zero-pad every matmul dimension to a multiple of 128 (full-lane MXU,
    # lane-dense output).  Zero padding is exact for both matmuls.
    F_pad = _round_up(F, 128)
    V_pad = _round_up(V, 128)
    C_pad = _round_up(C, 128)

    if F_pad != F:
        x_bf = jnp.pad(x_bf, ((0, 0), (0, F_pad - F)))
        w_bf = jnp.pad(w_bf, ((0, 0), (0, F_pad - F)))
    if V_pad != V:
        w_bf = jnp.pad(w_bf, ((0, V_pad - V), (0, 0)))
        b2d = jnp.pad(b2d, ((0, 0), (0, V_pad - V)))
        cv_bf = jnp.pad(cv_bf, ((0, 0), (0, V_pad - V)))
    if C_pad != C:
        cv_bf = jnp.pad(cv_bf, ((0, C_pad - C), (0, 0)))

    # Additive softmax mask for the padded class columns (resident, tiny).
    mask = jnp.where(jnp.arange(C_pad) < C, 0.0, -jnp.inf)
    mask = mask.astype(jnp.float32).reshape(1, C_pad)

    TB, B_pad, vmem_limit = _pick_tiling(B, F_pad, V_pad, C_pad)
    if B_pad != B:
        x_bf = jnp.pad(x_bf, ((0, B_pad - B), (0, 0)))

    grid = (B_pad // TB,)

    cost = pl.CostEstimate(
        flops=2 * B_pad * (F_pad * V_pad + V_pad * C_pad),
        transcendentals=B_pad * C_pad,
        bytes_accessed=(2 * (B_pad * F_pad + V_pad * F_pad + C_pad * V_pad)
                        + 4 * (V_pad + C_pad + B_pad * C_pad)),
    )

    def run(single_buffer_residents):
        # Constant-index residents only need one VMEM buffer.
        res_kw = ({"pipeline_mode": pl.Buffered(1)}
                  if single_buffer_residents else {})
        in_specs = [
            pl.BlockSpec((TB, F_pad), lambda i: (i, 0)),              # x tile (pipelined)
            pl.BlockSpec((V_pad, F_pad), lambda i: (0, 0), **res_kw),  # W resident
            pl.BlockSpec((1, V_pad), lambda i: (0, 0), **res_kw),      # bias resident
            pl.BlockSpec((C_pad, V_pad), lambda i: (0, 0), **res_kw),  # classVectors resident
            pl.BlockSpec((1, C_pad), lambda i: (0, 0), **res_kw),      # pad mask resident
        ]
        return pl.pallas_call(
            _network_kernel,
            out_shape=jax.ShapeDtypeStruct((B_pad, C_pad), jnp.float32),
            grid=grid,
            in_specs=in_specs,
            out_specs=pl.BlockSpec((TB, C_pad), lambda i: (i, 0)),
            compiler_params=pltpu.CompilerParams(
                dimension_semantics=("parallel",),
                vmem_limit_bytes=vmem_limit,
            ),
            cost_estimate=cost,
        )(x_bf, w_bf, b2d, cv_bf, mask)

    try:
        out = run(True)
    except Exception:
        # Older JAX without BlockSpec(pipeline_mode=...): fall back to defaults.
        out = run(False)

    return out[:B, :C]


if __name__ == "__main__":
    # Small, deterministic example shapes consistent with the module's forward.
    B = 8            # batch of image features
    F = 32           # feature_dim
    V = 16           # vector_dim
    C = 8            # number of class vectors

    key = jax.random.PRNGKey(0)
    k_x, k_w, k_b, k_cv = jax.random.split(key, 4)

    image_features = jax.random.normal(k_x, (B, F), dtype=jnp.float32)
    class_vectors = jax.random.normal(k_cv, (C, V), dtype=jnp.float32)

    # Deterministic "Linear" parameters (PyTorch layout: weight [V, F], bias [V]).
    w = jax.random.normal(k_w, (V, F), dtype=jnp.float32) * 0.1
    b = jax.random.normal(k_b, (V,), dtype=jnp.float32) * 0.1

    out = network_forward(image_features, w, b, class_vectors)
    out = jax.block_until_ready(out)

    # Reference (pure JAX, f32 end to end).
    h_ref = image_features @ w.T + b
    logits_ref = h_ref @ class_vectors.T
    ref = jax.nn.softmax(logits_ref, axis=1)

    assert out.shape == (B, C)
    # bf16 MXU operands (f32 accumulation) -> slightly looser element tolerance.
    assert jnp.allclose(out, ref, atol=2e-2, rtol=2e-2)
    # Exact f32 division in the softmax -> each row sums to 1 to f32 precision.
    assert jnp.allclose(jnp.sum(out, axis=1), 1.0, atol=1e-5)

    print("KERNEL_OK")
</pallas_src>

<mosaic_0001>
module attributes {stable_mosaic.version = 11 : i64} {
  func.func @_network_kernel(%arg0: i32, %arg1: memref<8x128xbf16, #tpu.memory_space<vmem>>, %arg2: memref<128x128xbf16, #tpu.memory_space<vmem>>, %arg3: memref<1x128xf32, #tpu.memory_space<vmem>>, %arg4: memref<128x128xbf16, #tpu.memory_space<vmem>>, %arg5: memref<1x128xf32, #tpu.memory_space<vmem>>, %arg6: memref<8x128xf32, #tpu.memory_space<vmem>>) attributes {dimension_semantics = [#tpu.dimension_semantics<parallel>], iteration_bounds = array<i64: 1>, scalar_prefetch = 0 : i64, scratch_operands = 0 : i64, tpu.core_type = #tpu.core_type<tc>, window_params = [{transform_indices = @transform_0, window_bounds = array<i64: 8, 128>}, {pipeline_mode = #tpu.pipeline_mode<synchronous>, transform_indices = @transform_1, window_bounds = array<i64: 128, 128>}, {pipeline_mode = #tpu.pipeline_mode<synchronous>, transform_indices = @transform_2, window_bounds = array<i64: 1, 128>}, {pipeline_mode = #tpu.pipeline_mode<synchronous>, transform_indices = @transform_3, window_bounds = array<i64: 128, 128>}, {pipeline_mode = #tpu.pipeline_mode<synchronous>, transform_indices = @transform_4, window_bounds = array<i64: 1, 128>}, {transform_indices = @transform_5, window_bounds = array<i64: 8, 128>}]} {
    %c0 = arith.constant 0 : index
    %c0_0 = arith.constant 0 : index
    %0 = vector.load %arg1[%c0, %c0_0] : memref<8x128xbf16, #tpu.memory_space<vmem>>, vector<8x128xbf16>
    %c0_1 = arith.constant 0 : index
    %c0_2 = arith.constant 0 : index
    %1 = vector.load %arg2[%c0_1, %c0_2] : memref<128x128xbf16, #tpu.memory_space<vmem>>, vector<128x128xbf16>
    %cst = arith.constant dense<0.000000e+00> : vector<8x128xf32>
    %2 = tpu.matmul %0, %1, %cst {dimension_numbers = #tpu.dot_dimension_numbers<[1], [1], [0], [0], [0, 0, 1, 0], [], []>} : vector<8x128xbf16>, vector<128x128xbf16>, vector<8x128xf32> -> vector<8x128xf32>
    %c0_3 = arith.constant 0 : index
    %c0_4 = arith.constant 0 : index
    %3 = vector.load %arg3[%c0_3, %c0_4] : memref<1x128xf32, #tpu.memory_space<vmem>>, vector<1x128xf32>
    %4 = vector.broadcast %3 : vector<1x128xf32> to vector<8x128xf32>
    %5 = arith.addf %2, %4 : vector<8x128xf32>
    %6 = arith.truncf %5 : vector<8x128xf32> to vector<8x128xbf16>
    %c0_5 = arith.constant 0 : index
    %c0_6 = arith.constant 0 : index
    %7 = vector.load %arg4[%c0_5, %c0_6] : memref<128x128xbf16, #tpu.memory_space<vmem>>, vector<128x128xbf16>
    %cst_7 = arith.constant dense<0.000000e+00> : vector<8x128xf32>
    %8 = tpu.matmul %6, %7, %cst_7 {dimension_numbers = #tpu.dot_dimension_numbers<[1], [1], [0], [0], [0, 0, 1, 0], [], []>} : vector<8x128xbf16>, vector<128x128xbf16>, vector<8x128xf32> -> vector<8x128xf32>
    %c0_8 = arith.constant 0 : index
    %c0_9 = arith.constant 0 : index
    %9 = vector.load %arg5[%c0_8, %c0_9] : memref<1x128xf32, #tpu.memory_space<vmem>>, vector<1x128xf32>
    %10 = vector.broadcast %9 : vector<1x128xf32> to vector<8x128xf32>
    %11 = arith.addf %8, %10 : vector<8x128xf32>
    %cst_10 = arith.constant dense<0xFF800000> : vector<8xf32>
    %12 = vector.multi_reduction <maximumf>, %11, %cst_10 [1] : vector<8x128xf32> to vector<8xf32>
    %13 = vector.shape_cast %12 : vector<8xf32> to vector<8x1xf32>
    %14 = vector.broadcast %13 : vector<8x1xf32> to vector<8x128xf32>
    %15 = arith.subf %11, %14 : vector<8x128xf32>
    %16 = math.exp %15 : vector<8x128xf32>
    %cst_11 = arith.constant dense<0.000000e+00> : vector<8xf32>
    %17 = vector.multi_reduction <add>, %16, %cst_11 [1] : vector<8x128xf32> to vector<8xf32>
    %18 = vector.shape_cast %17 : vector<8xf32> to vector<8x1xf32>
    %19 = vector.broadcast %18 : vector<8x1xf32> to vector<8x128xf32>
    %20 = arith.divf %16, %19 : vector<8x128xf32>
    %c0_12 = arith.constant 0 : index
    %c0_13 = arith.constant 0 : index
    %21 = vector.load %arg6[%c0_12, %c0_13] : memref<8x128xf32, #tpu.memory_space<vmem>>, vector<8x128xf32>
    tpu.vector_store %arg6[%c0_12, %c0_13], %20 {strides = array<i32>} : memref<8x128xf32, #tpu.memory_space<vmem>>, vector<8x128xf32>,
    return
  }
  func.func @transform_0(%arg0: i32) -> (i32, i32) {
    %c0_i32 = arith.constant 0 : i32
    %c0_i32_0 = arith.constant 0 : i32
    return %arg0, %c0_i32 : i32, i32
  }
  func.func @transform_1(%arg0: i32) -> (i32, i32) {
    %c0_i32 = arith.constant 0 : i32
    %c0_i32_0 = arith.constant 0 : i32
    %c0_i32_1 = arith.constant 0 : i32
    return %c0_i32, %c0_i32_0 : i32, i32
  }
  func.func @transform_2(%arg0: i32) -> (i32, i32) {
    %c0_i32 = arith.constant 0 : i32
    %c0_i32_0 = arith.constant 0 : i32
    %c0_i32_1 = arith.constant 0 : i32
    return %c0_i32, %c0_i32_0 : i32, i32
  }
  func.func @transform_3(%arg0: i32) -> (i32, i32) {
    %c0_i32 = arith.constant 0 : i32
    %c0_i32_0 = arith.constant 0 : i32
    %c0_i32_1 = arith.constant 0 : i32
    return %c0_i32, %c0_i32_0 : i32, i32
  }
  func.func @transform_4(%arg0: i32) -> (i32, i32) {
    %c0_i32 = arith.constant 0 : i32
    %c0_i32_0 = arith.constant 0 : i32
    %c0_i32_1 = arith.constant 0 : i32
    return %c0_i32, %c0_i32_0 : i32, i32
  }
  func.func @transform_5(%arg0: i32) -> (i32, i32) {
    %c0_i32 = arith.constant 0 : i32
    %c0_i32_0 = arith.constant 0 : i32
    return %arg0, %c0_i32 : i32, i32
  }
}

module attributes {stable_mosaic.version = 11 : i64} {
  func.func @_network_kernel(%arg0: i32, %arg1: memref<8x128xbf16, #tpu.memory_space<vmem>>, %arg2: memref<128x128xbf16, #tpu.memory_space<vmem>>, %arg3: memref<1x128xf32, #tpu.memory_space<vmem>>, %arg4: memref<128x128xbf16, #tpu.memory_space<vmem>>, %arg5: memref<1x128xf32, #tpu.memory_space<vmem>>, %arg6: memref<8x128xf32, #tpu.memory_space<vmem>>) attributes {dimension_semantics = [#tpu.dimension_semantics<parallel>], iteration_bounds = array<i64: 1>, scalar_prefetch = 0 : i64, scratch_operands = 0 : i64, tpu.core_type = #tpu.core_type<tc>, window_params = [{transform_indices = @transform_0, window_bounds = array<i64: 8, 128>}, {pipeline_mode = #tpu.pipeline_mode<synchronous>, transform_indices = @transform_1, window_bounds = array<i64: 128, 128>}, {pipeline_mode = #tpu.pipeline_mode<synchronous>, transform_indices = @transform_2, window_bounds = array<i64: 1, 128>}, {pipeline_mode = #tpu.pipeline_mode<synchronous>, transform_indices = @transform_3, window_bounds = array<i64: 128, 128>}, {pipeline_mode = #tpu.pipeline_mode<synchronous>, transform_indices = @transform_4, window_bounds = array<i64: 1, 128>}, {transform_indices = @transform_5, window_bounds = array<i64: 8, 128>}]} {
    %c0 = arith.constant 0 : index
    %c0_0 = arith.constant 0 : index
    %0 = vector.load %arg1[%c0, %c0_0] : memref<8x128xbf16, #tpu.memory_space<vmem>>, vector<8x128xbf16>
    %c0_1 = arith.constant 0 : index
    %c0_2 = arith.constant 0 : index
    %1 = vector.load %arg2[%c0_1, %c0_2] : memref<128x128xbf16, #tpu.memory_space<vmem>>, vector<128x128xbf16>
    %cst = arith.constant dense<0.000000e+00> : vector<8x128xf32>
    %2 = tpu.matmul %0, %1, %cst {dimension_numbers = #tpu.dot_dimension_numbers<[1], [1], [0], [0], [0, 0, 1, 0], [], []>} : vector<8x128xbf16>, vector<128x128xbf16>, vector<8x128xf32> -> vector<8x128xf32>
    %c0_3 = arith.constant 0 : index
    %c0_4 = arith.constant 0 : index
    %3 = vector.load %arg3[%c0_3, %c0_4] : memref<1x128xf32, #tpu.memory_space<vmem>>, vector<1x128xf32>
    %4 = vector.broadcast %3 : vector<1x128xf32> to vector<8x128xf32>
    %5 = arith.addf %2, %4 : vector<8x128xf32>
    %6 = arith.truncf %5 : vector<8x128xf32> to vector<8x128xbf16>
    %c0_5 = arith.constant 0 : index
    %c0_6 = arith.constant 0 : index
    %7 = vector.load %arg4[%c0_5, %c0_6] : memref<128x128xbf16, #tpu.memory_space<vmem>>, vector<128x128xbf16>
    %cst_7 = arith.constant dense<0.000000e+00> : vector<8x128xf32>
    %8 = tpu.matmul %6, %7, %cst_7 {dimension_numbers = #tpu.dot_dimension_numbers<[1], [1], [0], [0], [0, 0, 1, 0], [], []>} : vector<8x128xbf16>, vector<128x128xbf16>, vector<8x128xf32> -> vector<8x128xf32>
    %c0_8 = arith.constant 0 : index
    %c0_9 = arith.constant 0 : index
    %9 = vector.load %arg5[%c0_8, %c0_9] : memref<1x128xf32, #tpu.memory_space<vmem>>, vector<1x128xf32>
    %10 = vector.broadcast %9 : vector<1x128xf32> to vector<8x128xf32>
    %11 = arith.addf %8, %10 : vector<8x128xf32>
    %cst_10 = arith.constant dense<0xFF800000> : vector<8xf32>
    %12 = vector.multi_reduction <maximumf>, %11, %cst_10 [1] : vector<8x128xf32> to vector<8xf32>
    %13 = vector.shape_cast %12 : vector<8xf32> to vector<8x1xf32>
    %14 = vector.broadcast %13 : vector<8x1xf32> to vector<8x128xf32>
    %15 = arith.subf %11, %14 : vector<8x128xf32>
    %16 = math.exp %15 : vector<8x128xf32>
    %cst_11 = arith.constant dense<0.000000e+00> : vector<8xf32>
    %17 = vector.multi_reduction <add>, %16, %cst_11 [1] : vector<8x128xf32> to vector<8xf32>
    %18 = vector.shape_cast %17 : vector<8xf32> to vector<8x1xf32>
    %19 = vector.broadcast %18 : vector<8x1xf32> to vector<8x128xf32>
    %20 = arith.divf %16, %19 : vector<8x128xf32>
    %c0_12 = arith.constant 0 : index
    %c0_13 = arith.constant 0 : index
    %21 = vector.load %arg6[%c0_12, %c0_13] : memref<8x128xf32, #tpu.memory_space<vmem>>, vector<8x128xf32>
    tpu.vector_store %arg6[%c0_12, %c0_13], %20 {strides = array<i32>} : memref<8x128xf32, #tpu.memory_space<vmem>>, vector<8x128xf32>,
    return
  }
  func.func @transform_0(%arg0: i32) -> (i32, i32) {
    %c0_i32 = arith.constant 0 : i32
    %c0_i32_0 = arith.constant 0 : i32
    return %arg0, %c0_i32 : i32, i32
  }
  func.func @transform_1(%arg0: i32) -> (i32, i32) {
    %c0_i32 = arith.constant 0 : i32
    %c0_i32_0 = arith.constant 0 : i32
    %c0_i32_1 = arith.constant 0 : i32
    return %c0_i32, %c0_i32_0 : i32, i32
  }
  func.func @transform_2(%arg0: i32) -> (i32, i32) {
    %c0_i32 = arith.constant 0 : i32
    %c0_i32_0 = arith.constant 0 : i32
    %c0_i32_1 = arith.constant 0 : i32
    return %c0_i32, %c0_i32_0 : i32, i32
  }
  func.func @transform_3(%arg0: i32) -> (i32, i32) {
    %c0_i32 = arith.constant 0 : i32
    %c0_i32_0 = arith.constant 0 : i32
    %c0_i32_1 = arith.constant 0 : i32
    return %c0_i32, %c0_i32_0 : i32, i32
  }
  func.func @transform_4(%arg0: i32) -> (i32, i32) {
    %c0_i32 = arith.constant 0 : i32
    %c0_i32_0 = arith.constant 0 : i32
    %c0_i32_1 = arith.constant 0 : i32
    return %c0_i32, %c0_i32_0 : i32, i32
  }
  func.func @transform_5(%arg0: i32) -> (i32, i32) {
    %c0_i32 = arith.constant 0 : i32
    %c0_i32_0 = arith.constant 0 : i32
    return %arg0, %c0_i32 : i32, i32
  }
}

</mosaic_0001>

<llo_original>
// kernel: tpu_custom_call.1
$region0: #{tpu_custom_call.1}
  #allocation0 [shape = 'u32[]', space=smem, size = 0x4, offset = 0x4, fixed_abs, tag = 'smem constant byte address 0x4 - core index']
  #allocation1 [shape = 'u32[144,128]{1,0:T(1,128)}', space=vmem, size = 0x12000, scoped, tag = 'internal scratch']
  %s0 = inlined_call_operand.hbm [shape: bf16[8,128], index: 0, kind: input, shape index: {}]
  %s1 = inlined_call_operand.hbm [shape: bf16[128,128], index: 1, kind: input, shape index: {}]
  %s2 = inlined_call_operand.vmem [shape: f32[1,128], index: 2, kind: input, shape index: {}]
  %s3 = inlined_call_operand.hbm [shape: bf16[128,128], index: 3, kind: input, shape index: {}]
  %s4 = inlined_call_operand.vmem [shape: f32[1,128], index: 4, kind: input, shape index: {}]
  %s5 = inlined_call_operand.hbm [shape: f32[8,128], index: 5, kind: output, shape index: {}]
  %s6 = sld [smem:[#allocation0]]
  $region42: #{tpu_custom_call.1} parent=0
    _
  %s8 = ssub.s32 1, %s6
  %s9 = scalar_select 0, %s8, %s6
  $region1: #{tpu_custom_call.1} parent=0
    #allocation2 [shape = 'u8[2048]{0}', space=vmem, size = 0x800, scoped, tag = 'input window, operand 0, single buffered']
    #allocation3 [shape = 's32[1]{0}', space=sflag, size = 0x4, scoped, tag = 'scoped memory for tpu_custom_call.1']
    #allocation4 [shape = 's32[1]{0}', space=sflag, size = 0x4, scoped, tag = 'scoped memory for tpu_custom_call.1']
    #allocation5 [shape = 'u8[32768]{0}', space=vmem, size = 0x8000, scoped, tag = 'input window, operand 1, single buffered']
    #allocation6 [shape = 's32[1]{0}', space=sflag, size = 0x4, scoped, tag = 'scoped memory for tpu_custom_call.1']
    #allocation7 [shape = 'u8[32768]{0}', space=vmem, size = 0x8000, scoped, tag = 'input window, operand 3, single buffered']
    #allocation8 [shape = 'u8[4096]{0}', space=vmem, size = 0x1000, scoped, tag = 'output window, operand 0, single buffered']
    %10 = vsyncpa [#allocation3], 0
    %11 = vsyncpa [#allocation6], 0
    %12 = vsyncpa [#allocation4], 0
    // Predicated region
    $region2: #{tpu_custom_call.1} parent=1 // pred_check
      _
    $region3: #{tpu_custom_call.1} parent=1 // pred_check_branch
      %14 = sbr.rel (0) target = $region5
    $region4: #{tpu_custom_call.1} parent=1 // pred_region
      %s16 = ssub.s32 64, 64
      %17 = vsyncadd [#allocation3], %s16
      %s19 = sshll.u32 [#allocation2], 4
      %s20 = int_to_ptr.vmem [resolvable:$true] %s19
      %22 = dma.hbm_to_vmem [thread:$0]  %s0, 64, %s20, [#allocation3]
    $region5: #{tpu_custom_call.1} parent=1 // pred_fallthru
      _
    // Predicated region
    $region6: #{tpu_custom_call.1} parent=1 // pred_check
      _
    $region7: #{tpu_custom_call.1} parent=1 // pred_check_branch
      %24 = sbr.rel (0) target = $region9
    $region8: #{tpu_custom_call.1} parent=1 // pred_region
      %s26 = ssub.s32 1024, 1024
      %27 = vsyncadd [#allocation6], %s26
      %s28 = sshll.u32 [#allocation5], 4
      %s29 = int_to_ptr.vmem [resolvable:$true] %s28
      %34 = dma.hbm_to_vmem [thread:$0]  %s1, 1024, %s29, [#allocation6], 64, 64, 4
    $region9: #{tpu_custom_call.1} parent=1 // pred_fallthru
      _
    // Predicated region
    $region10: #{tpu_custom_call.1} parent=1 // pred_check
      _
    $region11: #{tpu_custom_call.1} parent=1 // pred_check_branch
      %36 = sbr.rel (0) target = $region13
    $region12: #{tpu_custom_call.1} parent=1 // pred_region
      _
    $region13: #{tpu_custom_call.1} parent=1 // pred_fallthru
      _
    // Predicated region
    $region14: #{tpu_custom_call.1} parent=1 // pred_check
      _
    $region15: #{tpu_custom_call.1} parent=1 // pred_check_branch
      %38 = sbr.rel (0) target = $region17
    $region16: #{tpu_custom_call.1} parent=1 // pred_region
      %s40 = ssub.s32 1024, 1024
      %41 = vsyncadd [#allocation6], %s40
      %s42 = sshll.u32 [#allocation7], 4
      %s43 = int_to_ptr.vmem [resolvable:$true] %s42
      %48 = dma.hbm_to_vmem [thread:$0]  %s3, 1024, %s43, [#allocation6], 64, 64, 4
    $region17: #{tpu_custom_call.1} parent=1 // pred_fallthru
      _
    // Predicated region
    $region18: #{tpu_custom_call.1} parent=1 // pred_check
      _
    $region19: #{tpu_custom_call.1} parent=1 // pred_check_branch
      %50 = sbr.rel (0) target = $region21
    $region20: #{tpu_custom_call.1} parent=1 // pred_region
      _
    $region21: #{tpu_custom_call.1} parent=1 // pred_fallthru
      _
    // Predicated region
    $region22: #{tpu_custom_call.1} parent=1 // pred_check
      _
    $region23: #{tpu_custom_call.1} parent=1 // pred_check_branch
      %52 = sbr.rel (0) target = $region25
    $region24: #{tpu_custom_call.1} parent=1 // pred_region
      %53 = dma.done [#allocation3], 64
    $region25: #{tpu_custom_call.1} parent=1 // pred_fallthru
      _
    // Predicated region
    $region26: #{tpu_custom_call.1} parent=1 // pred_check
      _
    $region27: #{tpu_custom_call.1} parent=1 // pred_check_branch
      %55 = sbr.rel (0) target = $region29
    $region28: #{tpu_custom_call.1} parent=1 // pred_region
      %56 = dma.done [#allocation6], 1024
    $region29: #{tpu_custom_call.1} parent=1 // pred_fallthru
      _
    // Predicated region
    $region30: #{tpu_custom_call.1} parent=1 // pred_check
      _
    $region31: #{tpu_custom_call.1} parent=1 // pred_check_branch
      %58 = sbr.rel (0) target = $region33
    $region32: #{tpu_custom_call.1} parent=1 // pred_region
      %59 = dma.done [#allocation6], 1024
    $region33: #{tpu_custom_call.1} parent=1 // pred_fallthru
      _
    %v61 = vld [vmem:[#allocation2] sm:$0xf]
    %v62 = vld [vmem:[#allocation5] sm:$0xf]
    %v63 = vld [vmem:[#allocation5 + $0x4] sm:$0xf]
    %v64 = vld [vmem:[#allocation5 + $0x8] sm:$0xf]
    %v65 = vld [vmem:[#allocation5 + $0xc] sm:$0xf]
    %v66 = vld [vmem:[#allocation5 + $0x10] sm:$0xf]
    %v67 = vld [vmem:[#allocation5 + $0x14] sm:$0xf]
    %v68 = vld [vmem:[#allocation5 + $0x18] sm:$0xf]
    %v69 = vld [vmem:[#allocation5 + $0x1c] sm:$0xf]
    %v70 = vld [vmem:[#allocation5 + $0x20] sm:$0xf]
    %v71 = vld [vmem:[#allocation5 + $0x24] sm:$0xf]
    %v72 = vld [vmem:[#allocation5 + $0x28] sm:$0xf]
    %v73 = vld [vmem:[#allocation5 + $0x2c] sm:$0xf]
    %v74 = vld [vmem:[#allocation5 + $0x30] sm:$0xf]
    %v75 = vld [vmem:[#allocation5 + $0x34] sm:$0xf]
    %v76 = vld [vmem:[#allocation5 + $0x38] sm:$0xf]
    %v77 = vld [vmem:[#allocation5 + $0x3c] sm:$0xf]
    %v78 = vld [vmem:[%s2] sm:$0x1]
    %v80 = vlaneseq
    %v81 = vshrl.u32 %v80, 7
    %v82 = vsub.s32 0, %v81
    %v83 = vrot.slane %v78, %v82
    %v101 = vunpack.c.l.b16 %v62
    %v102 = vunpack.c.l.b16 %v63
    %v103 = vunpack.c.l.b16 %v64
    %v104 = vunpack.c.l.b16 %v65
    %v105 = vunpack.c.l.b16 %v66
    %v106 = vunpack.c.l.b16 %v67
    %v107 = vunpack.c.l.b16 %v68
    %v108 = vunpack.c.l.b16 %v69
    %v109 = vunpack.c.l.b16 %v70
    %v110 = vunpack.c.l.b16 %v71
    %v111 = vunpack.c.l.b16 %v72
    %v112 = vunpack.c.l.b16 %v73
    %v113 = vunpack.c.l.b16 %v74
    %v114 = vunpack.c.l.b16 %v75
    %v115 = vunpack.c.l.b16 %v76
    %v116 = vunpack.c.l.b16 %v77
    %v117 = vpack.c.b16 %v102, %v101
    %v118 = vpack.c.b16 %v104, %v103
    %v119 = vpack.c.b16 %v106, %v105
    %v120 = vpack.c.b16 %v108, %v107
    %v121 = vpack.c.b16 %v110, %v109
    %v122 = vpack.c.b16 %v112, %v111
    %v123 = vpack.c.b16 %v114, %v113
    %v124 = vpack.c.b16 %v116, %v115
    %133 = vmatprep.subr.bf16.mxu0 0
    %134 = vmatpush1.bf16.xpose.msra.mxu0 %v124
    %135 = vmatprep.subr.bf16.mxu0 0
    %136 = vmatpush1.bf16.xpose.msra.mxu0 %v123
    %137 = vmatprep.subr.bf16.mxu0 0
    %138 = vmatpush1.bf16.xpose.msra.mxu0 %v122
    %139 = vmatprep.subr.bf16.mxu0 0
    %140 = vmatpush1.bf16.xpose.msra.mxu0 %v121
    %141 = vmatprep.subr.bf16.mxu0 0
    %142 = vmatpush1.bf16.xpose.msra.mxu0 %v120
    %143 = vmatprep.subr.bf16.mxu0 0
    %144 = vmatpush1.bf16.xpose.msra.mxu0 %v119
    %145 = vmatprep.subr.bf16.mxu0 0
    %146 = vmatpush1.bf16.xpose.msra.mxu0 %v118
    %147 = vmatprep.subr.bf16.mxu0 0
    %148 = vmatpush1.bf16.xpose.msra.mxu0 %v117
    %149 = vmatprep.subr.bf16.mxu0 0
    %150 = vmatpush2.bf16.xpose.msra.mxu0 0
    %151 = vmatprep.subr.bf16.mxu0 0
    %152 = vmatpush2.bf16.xpose.msra.mxu0 0
    %153 = vmatprep.subr.bf16.mxu0 0
    %154 = vmatpush2.bf16.xpose.msra.mxu0 0
    %155 = vmatprep.subr.bf16.mxu0 0
    %156 = vmatpush2.bf16.xpose.msra.mxu0 0
    %157 = vmatprep.subr.bf16.mxu0 0
    %158 = vmatpush2.bf16.xpose.msra.mxu0 0
    %159 = vmatprep.subr.bf16.mxu0 0
    %160 = vmatpush2.bf16.xpose.msra.mxu0 0
    %161 = vmatprep.subr.bf16.mxu0 0
    %162 = vmatpush2.bf16.xpose.msra.mxu0 0
    %163 = vmatprep.subr.bf16.mxu0 0
    %164 = vmatpush2.bf16.xpose.msra.mxu0 0
    %165 = vmatprep.mubr.bf16.mxu0 0
    %166 = vmatmul.mubr.bf16.gmra.mxu0 %v61
    %v167 = vpop.f32.mrf.mxu0
    %v168 = vadd.f32 %v83, %v167
    %v169 = vpop.f32.mrf.mxu0
    %v170 = vpop.f32.mrf.mxu0
    %v171 = vpop.f32.mrf.mxu0
    %172 = vdwg.mxu0
    %v173 = vpack.c.bf16 %v168, %v168
    %v174 = vld [vmem:[#allocation7] sm:$0xf]
    %v175 = vld [vmem:[#allocation7 + $0x4] sm:$0xf]
    %v176 = vld [vmem:[#allocation7 + $0x8] sm:$0xf]
    %v177 = vld [vmem:[#allocation7 + $0xc] sm:$0xf]
    %v178 = vld [vmem:[#allocation7 + $0x10] sm:$0xf]
    %v179 = vld [vmem:[#allocation7 + $0x14] sm:$0xf]
    %v180 = vld [vmem:[#allocation7 + $0x18] sm:$0xf]
    %v181 = vld [vmem:[#allocation7 + $0x1c] sm:$0xf]
    %v182 = vld [vmem:[#allocation7 + $0x20] sm:$0xf]
    %v183 = vld [vmem:[#allocation7 + $0x24] sm:$0xf]
    %v184 = vld [vmem:[#allocation7 + $0x28] sm:$0xf]
    %v185 = vld [vmem:[#allocation7 + $0x2c] sm:$0xf]
    %v186 = vld [vmem:[#allocation7 + $0x30] sm:$0xf]
    %v187 = vld [vmem:[#allocation7 + $0x34] sm:$0xf]
    %v188 = vld [vmem:[#allocation7 + $0x38] sm:$0xf]
    %v189 = vld [vmem:[#allocation7 + $0x3c] sm:$0xf]
    %v190 = vld [vmem:[%s4] sm:$0x1]
    %v192 = vlaneseq
    %v193 = vshrl.u32 %v192, 7
    %v194 = vsub.s32 0, %v193
    %v195 = vrot.slane %v190, %v194
    %v213 = vunpack.c.l.b16 %v174
    %v214 = vunpack.c.l.b16 %v175
    %v215 = vunpack.c.l.b16 %v176
    %v216 = vunpack.c.l.b16 %v177
    %v217 = vunpack.c.l.b16 %v178
    %v218 = vunpack.c.l.b16 %v179
    %v219 = vunpack.c.l.b16 %v180
    %v220 = vunpack.c.l.b16 %v181
    %v221 = vunpack.c.l.b16 %v182
    %v222 = vunpack.c.l.b16 %v183
    %v223 = vunpack.c.l.b16 %v184
    %v224 = vunpack.c.l.b16 %v185
    %v225 = vunpack.c.l.b16 %v186
    %v226 = vunpack.c.l.b16 %v187
    %v227 = vunpack.c.l.b16 %v188
    %v228 = vunpack.c.l.b16 %v189
    %v229 = vpack.c.b16 %v214, %v213
    %v230 = vpack.c.b16 %v216, %v215
    %v231 = vpack.c.b16 %v218, %v217
    %v232 = vpack.c.b16 %v220, %v219
    %v233 = vpack.c.b16 %v222, %v221
    %v234 = vpack.c.b16 %v224, %v223
    %v235 = vpack.c.b16 %v226, %v225
    %v236 = vpack.c.b16 %v228, %v227
    %245 = vmatprep.subr.bf16.mxu0 0
    %246 = vmatpush1.bf16.xpose.msra.mxu0 %v236
    %247 = vmatprep.subr.bf16.mxu0 0
    %248 = vmatpush1.bf16.xpose.msra.mxu0 %v235
    %249 = vmatprep.subr.bf16.mxu0 0
    %250 = vmatpush1.bf16.xpose.msra.mxu0 %v234
    %251 = vmatprep.subr.bf16.mxu0 0
    %252 = vmatpush1.bf16.xpose.msra.mxu0 %v233
    %253 = vmatprep.subr.bf16.mxu0 0
    %254 = vmatpush1.bf16.xpose.msra.mxu0 %v232
    %255 = vmatprep.subr.bf16.mxu0 0
    %256 = vmatpush1.bf16.xpose.msra.mxu0 %v231
    %257 = vmatprep.subr.bf16.mxu0 0
    %258 = vmatpush1.bf16.xpose.msra.mxu0 %v230
    %259 = vmatprep.subr.bf16.mxu0 0
    %260 = vmatpush1.bf16.xpose.msra.mxu0 %v229
    %261 = vmatprep.subr.bf16.mxu0 0
    %262 = vmatpush2.bf16.xpose.msra.mxu0 0
    %263 = vmatprep.subr.bf16.mxu0 0
    %264 = vmatpush2.bf16.xpose.msra.mxu0 0
    %265 = vmatprep.subr.bf16.mxu0 0
    %266 = vmatpush2.bf16.xpose.msra.mxu0 0
    %267 = vmatprep.subr.bf16.mxu0 0
    %268 = vmatpush2.bf16.xpose.msra.mxu0 0
    %269 = vmatprep.subr.bf16.mxu0 0
    %270 = vmatpush2.bf16.xpose.msra.mxu0 0
    %271 = vmatprep.subr.bf16.mxu0 0
    %272 = vmatpush2.bf16.xpose.msra.mxu0 0
    %273 = vmatprep.subr.bf16.mxu0 0
    %274 = vmatpush2.bf16.xpose.msra.mxu0 0
    %275 = vmatprep.subr.bf16.mxu0 0
    %276 = vmatpush2.bf16.xpose.msra.mxu0 0
    %277 = vmatprep.mubr.bf16.mxu0 0
    %278 = vmatmul.mubr.bf16.gmra.mxu0 %v173
    %v279 = vpop.f32.mrf.mxu0
    %v280 = vadd.f32 %v195, %v279
    %v281 = vpop.f32.mrf.mxu0
    %v282 = vpop.f32.mrf.mxu0
    %v283 = vpop.f32.mrf.mxu0
    %284 = vdwg.mxu0
    %285 = vmax.xlane.f32.xlu0 %v280
    %v286 = vpop.xlane.xlu0 %285
    %v287 = vsub.f32 %v280, %v286
    %v288 = vmul.f32 %v287, 1.442695
    %v289 = vpow.pop %v288
    %290 = vadd.xlane.f32.xlu0 %v289
    %v291 = vpop.xlane.xlu0 %290
    %v292 = vrcp.pop %v291
    %v293 = vmul.f32 %v289, %v292
    %294 = vst [vmem:[#allocation8] sm:$0xff] %v293
    // Predicated region
    $region34: #{tpu_custom_call.1} parent=1 // pred_check
      _
    $region35: #{tpu_custom_call.1} parent=1 // pred_check_branch
      %296 = sbr.rel (0) target = $region37
    $region36: #{tpu_custom_call.1} parent=1 // pred_region
      %s298 = ssub.s32 128, 128
      %299 = vsyncadd [#allocation4], %s298
      %s301 = sshll.u32 [#allocation8], 4
      %s302 = int_to_ptr.vmem [resolvable:$true] %s301
      %304 = dma.vmem_to_hbm [thread:$0]  %s302, 128, %s5, [#allocation4]
    $region37: #{tpu_custom_call.1} parent=1 // pred_fallthru
      _
    // Predicated region
    $region38: #{tpu_custom_call.1} parent=1 // pred_check
      _
    $region39: #{tpu_custom_call.1} parent=1 // pred_check_branch
      %306 = sbr.rel (0) target = $region41
    $region40: #{tpu_custom_call.1} parent=1 // pred_region
      %307 = dma.done [#allocation4], 128
    $region41: #{tpu_custom_call.1} parent=1 // pred_fallthru
      _
    %308 = vsyncpa [#allocation3], 1
    %309 = vsyncpa [#allocation6], 1
    %310 = vsyncpa [#allocation4], 1

// kernel: tpu_custom_call.1
$region0: #{tpu_custom_call.1}
  #allocation0 [shape = 'u32[]', space=smem, size = 0x4, offset = 0x4, fixed_abs, tag = 'smem constant byte address 0x4 - core index']
  #allocation1 [shape = 'u32[144,128]{1,0:T(1,128)}', space=vmem, size = 0x12000, scoped, tag = 'internal scratch']
  %s0 = inlined_call_operand.hbm [shape: bf16[8,128], index: 0, kind: input, shape index: {}]
  %s1 = inlined_call_operand.hbm [shape: bf16[128,128], index: 1, kind: input, shape index: {}]
  %s2 = inlined_call_operand.vmem [shape: f32[1,128], index: 2, kind: input, shape index: {}]
  %s3 = inlined_call_operand.hbm [shape: bf16[128,128], index: 3, kind: input, shape index: {}]
  %s4 = inlined_call_operand.vmem [shape: f32[1,128], index: 4, kind: input, shape index: {}]
  %s5 = inlined_call_operand.hbm [shape: f32[8,128], index: 5, kind: output, shape index: {}]
  %s6 = sld [smem:[#allocation0]]
  $region42: #{tpu_custom_call.1} parent=0
    _
  %s8 = ssub.s32 1, %s6
  %s9 = scalar_select 0, %s8, %s6
  $region1: #{tpu_custom_call.1} parent=0
    #allocation2 [shape = 'u8[2048]{0}', space=vmem, size = 0x800, scoped, tag = 'input window, operand 0, single buffered']
    #allocation3 [shape = 's32[1]{0}', space=sflag, size = 0x4, scoped, tag = 'scoped memory for tpu_custom_call.1']
    #allocation4 [shape = 's32[1]{0}', space=sflag, size = 0x4, scoped, tag = 'scoped memory for tpu_custom_call.1']
    #allocation5 [shape = 'u8[32768]{0}', space=vmem, size = 0x8000, scoped, tag = 'input window, operand 1, single buffered']
    #allocation6 [shape = 's32[1]{0}', space=sflag, size = 0x4, scoped, tag = 'scoped memory for tpu_custom_call.1']
    #allocation7 [shape = 'u8[32768]{0}', space=vmem, size = 0x8000, scoped, tag = 'input window, operand 3, single buffered']
    #allocation8 [shape = 'u8[4096]{0}', space=vmem, size = 0x1000, scoped, tag = 'output window, operand 0, single buffered']
    %10 = vsyncpa [#allocation3], 0
    %11 = vsyncpa [#allocation6], 0
    %12 = vsyncpa [#allocation4], 0
    // Predicated region
    $region2: #{tpu_custom_call.1} parent=1 // pred_check
      _
    $region3: #{tpu_custom_call.1} parent=1 // pred_check_branch
      %14 = sbr.rel (0) target = $region5
    $region4: #{tpu_custom_call.1} parent=1 // pred_region
      %s16 = ssub.s32 64, 64
      %17 = vsyncadd [#allocation3], %s16
      %s19 = sshll.u32 [#allocation2], 4
      %s20 = int_to_ptr.vmem [resolvable:$true] %s19
      %22 = dma.hbm_to_vmem [thread:$0]  %s0, 64, %s20, [#allocation3]
    $region5: #{tpu_custom_call.1} parent=1 // pred_fallthru
      _
    // Predicated region
    $region6: #{tpu_custom_call.1} parent=1 // pred_check
      _
    $region7: #{tpu_custom_call.1} parent=1 // pred_check_branch
      %24 = sbr.rel (0) target = $region9
    $region8: #{tpu_custom_call.1} parent=1 // pred_region
      %s26 = ssub.s32 1024, 1024
      %27 = vsyncadd [#allocation6], %s26
      %s28 = sshll.u32 [#allocation5], 4
      %s29 = int_to_ptr.vmem [resolvable:$true] %s28
      %34 = dma.hbm_to_vmem [thread:$0]  %s1, 1024, %s29, [#allocation6], 64, 64, 4
    $region9: #{tpu_custom_call.1} parent=1 // pred_fallthru
      _
    // Predicated region
    $region10: #{tpu_custom_call.1} parent=1 // pred_check
      _
    $region11: #{tpu_custom_call.1} parent=1 // pred_check_branch
      %36 = sbr.rel (0) target = $region13
    $region12: #{tpu_custom_call.1} parent=1 // pred_region
      _
    $region13: #{tpu_custom_call.1} parent=1 // pred_fallthru
      _
    // Predicated region
    $region14: #{tpu_custom_call.1} parent=1 // pred_check
      _
    $region15: #{tpu_custom_call.1} parent=1 // pred_check_branch
      %38 = sbr.rel (0) target = $region17
    $region16: #{tpu_custom_call.1} parent=1 // pred_region
      %s40 = ssub.s32 1024, 1024
      %41 = vsyncadd [#allocation6], %s40
      %s42 = sshll.u32 [#allocation7], 4
      %s43 = int_to_ptr.vmem [resolvable:$true] %s42
      %48 = dma.hbm_to_vmem [thread:$0]  %s3, 1024, %s43, [#allocation6], 64, 64, 4
    $region17: #{tpu_custom_call.1} parent=1 // pred_fallthru
      _
    // Predicated region
    $region18: #{tpu_custom_call.1} parent=1 // pred_check
      _
    $region19: #{tpu_custom_call.1} parent=1 // pred_check_branch
      %50 = sbr.rel (0) target = $region21
    $region20: #{tpu_custom_call.1} parent=1 // pred_region
      _
    $region21: #{tpu_custom_call.1} parent=1 // pred_fallthru
      _
    // Predicated region
    $region22: #{tpu_custom_call.1} parent=1 // pred_check
      _
    $region23: #{tpu_custom_call.1} parent=1 // pred_check_branch
      %52 = sbr.rel (0) target = $region25
    $region24: #{tpu_custom_call.1} parent=1 // pred_region
      %53 = dma.done [#allocation3], 64
    $region25: #{tpu_custom_call.1} parent=1 // pred_fallthru
      _
    // Predicated region
    $region26: #{tpu_custom_call.1} parent=1 // pred_check
      _
    $region27: #{tpu_custom_call.1} parent=1 // pred_check_branch
      %55 = sbr.rel (0) target = $region29
    $region28: #{tpu_custom_call.1} parent=1 // pred_region
      %56 = dma.done [#allocation6], 1024
    $region29: #{tpu_custom_call.1} parent=1 // pred_fallthru
      _
    // Predicated region
    $region30: #{tpu_custom_call.1} parent=1 // pred_check
      _
    $region31: #{tpu_custom_call.1} parent=1 // pred_check_branch
      %58 = sbr.rel (0) target = $region33
    $region32: #{tpu_custom_call.1} parent=1 // pred_region
      %59 = dma.done [#allocation6], 1024
    $region33: #{tpu_custom_call.1} parent=1 // pred_fallthru
      _
    %v61 = vld [vmem:[#allocation2] sm:$0xf]
    %v62 = vld [vmem:[#allocation5] sm:$0xf]
    %v63 = vld [vmem:[#allocation5 + $0x4] sm:$0xf]
    %v64 = vld [vmem:[#allocation5 + $0x8] sm:$0xf]
    %v65 = vld [vmem:[#allocation5 + $0xc] sm:$0xf]
    %v66 = vld [vmem:[#allocation5 + $0x10] sm:$0xf]
    %v67 = vld [vmem:[#allocation5 + $0x14] sm:$0xf]
    %v68 = vld [vmem:[#allocation5 + $0x18] sm:$0xf]
    %v69 = vld [vmem:[#allocation5 + $0x1c] sm:$0xf]
    %v70 = vld [vmem:[#allocation5 + $0x20] sm:$0xf]
    %v71 = vld [vmem:[#allocation5 + $0x24] sm:$0xf]
    %v72 = vld [vmem:[#allocation5 + $0x28] sm:$0xf]
    %v73 = vld [vmem:[#allocation5 + $0x2c] sm:$0xf]
    %v74 = vld [vmem:[#allocation5 + $0x30] sm:$0xf]
    %v75 = vld [vmem:[#allocation5 + $0x34] sm:$0xf]
    %v76 = vld [vmem:[#allocation5 + $0x38] sm:$0xf]
    %v77 = vld [vmem:[#allocation5 + $0x3c] sm:$0xf]
    %v78 = vld [vmem:[%s2] sm:$0x1]
    %v80 = vlaneseq
    %v81 = vshrl.u32 %v80, 7
    %v82 = vsub.s32 0, %v81
    %v83 = vrot.slane %v78, %v82
    %v101 = vunpack.c.l.b16 %v62
    %v102 = vunpack.c.l.b16 %v63
    %v103 = vunpack.c.l.b16 %v64
    %v104 = vunpack.c.l.b16 %v65
    %v105 = vunpack.c.l.b16 %v66
    %v106 = vunpack.c.l.b16 %v67
    %v107 = vunpack.c.l.b16 %v68
    %v108 = vunpack.c.l.b16 %v69
    %v109 = vunpack.c.l.b16 %v70
    %v110 = vunpack.c.l.b16 %v71
    %v111 = vunpack.c.l.b16 %v72
    %v112 = vunpack.c.l.b16 %v73
    %v113 = vunpack.c.l.b16 %v74
    %v114 = vunpack.c.l.b16 %v75
    %v115 = vunpack.c.l.b16 %v76
    %v116 = vunpack.c.l.b16 %v77
    %v117 = vpack.c.b16 %v102, %v101
    %v118 = vpack.c.b16 %v104, %v103
    %v119 = vpack.c.b16 %v106, %v105
    %v120 = vpack.c.b16 %v108, %v107
    %v121 = vpack.c.b16 %v110, %v109
    %v122 = vpack.c.b16 %v112, %v111
    %v123 = vpack.c.b16 %v114, %v113
    %v124 = vpack.c.b16 %v116, %v115
    %133 = vmatprep.subr.bf16.mxu0 0
    %134 = vmatpush1.bf16.xpose.msra.mxu0 %v124
    %135 = vmatprep.subr.bf16.mxu0 0
    %136 = vmatpush1.bf16.xpose.msra.mxu0 %v123
    %137 = vmatprep.subr.bf16.mxu0 0
    %138 = vmatpush1.bf16.xpose.msra.mxu0 %v122
    %139 = vmatprep.subr.bf16.mxu0 0
    %140 = vmatpush1.bf16.xpose.msra.mxu0 %v121
    %141 = vmatprep.subr.bf16.mxu0 0
    %142 = vmatpush1.bf16.xpose.msra.mxu0 %v120
    %143 = vmatprep.subr.bf16.mxu0 0
    %144 = vmatpush1.bf16.xpose.msra.mxu0 %v119
    %145 = vmatprep.subr.bf16.mxu0 0
    %146 = vmatpush1.bf16.xpose.msra.mxu0 %v118
    %147 = vmatprep.subr.bf16.mxu0 0
    %148 = vmatpush1.bf16.xpose.msra.mxu0 %v117
    %149 = vmatprep.subr.bf16.mxu0 0
    %150 = vmatpush2.bf16.xpose.msra.mxu0 0
    %151 = vmatprep.subr.bf16.mxu0 0
    %152 = vmatpush2.bf16.xpose.msra.mxu0 0
    %153 = vmatprep.subr.bf16.mxu0 0
    %154 = vmatpush2.bf16.xpose.msra.mxu0 0
    %155 = vmatprep.subr.bf16.mxu0 0
    %156 = vmatpush2.bf16.xpose.msra.mxu0 0
    %157 = vmatprep.subr.bf16.mxu0 0
    %158 = vmatpush2.bf16.xpose.msra.mxu0 0
    %159 = vmatprep.subr.bf16.mxu0 0
    %160 = vmatpush2.bf16.xpose.msra.mxu0 0
    %161 = vmatprep.subr.bf16.mxu0 0
    %162 = vmatpush2.bf16.xpose.msra.mxu0 0
    %163 = vmatprep.subr.bf16.mxu0 0
    %164 = vmatpush2.bf16.xpose.msra.mxu0 0
    %165 = vmatprep.mubr.bf16.mxu0 0
    %166 = vmatmul.mubr.bf16.gmra.mxu0 %v61
    %v167 = vpop.f32.mrf.mxu0
    %v168 = vadd.f32 %v83, %v167
    %v169 = vpop.f32.mrf.mxu0
    %v170 = vpop.f32.mrf.mxu0
    %v171 = vpop.f32.mrf.mxu0
    %172 = vdwg.mxu0
    %v173 = vpack.c.bf16 %v168, %v168
    %v174 = vld [vmem:[#allocation7] sm:$0xf]
    %v175 = vld [vmem:[#allocation7 + $0x4] sm:$0xf]
    %v176 = vld [vmem:[#allocation7 + $0x8] sm:$0xf]
    %v177 = vld [vmem:[#allocation7 + $0xc] sm:$0xf]
    %v178 = vld [vmem:[#allocation7 + $0x10] sm:$0xf]
    %v179 = vld [vmem:[#allocation7 + $0x14] sm:$0xf]
    %v180 = vld [vmem:[#allocation7 + $0x18] sm:$0xf]
    %v181 = vld [vmem:[#allocation7 + $0x1c] sm:$0xf]
    %v182 = vld [vmem:[#allocation7 + $0x20] sm:$0xf]
    %v183 = vld [vmem:[#allocation7 + $0x24] sm:$0xf]
    %v184 = vld [vmem:[#allocation7 + $0x28] sm:$0xf]
    %v185 = vld [vmem:[#allocation7 + $0x2c] sm:$0xf]
    %v186 = vld [vmem:[#allocation7 + $0x30] sm:$0xf]
    %v187 = vld [vmem:[#allocation7 + $0x34] sm:$0xf]
    %v188 = vld [vmem:[#allocation7 + $0x38] sm:$0xf]
    %v189 = vld [vmem:[#allocation7 + $0x3c] sm:$0xf]
    %v190 = vld [vmem:[%s4] sm:$0x1]
    %v192 = vlaneseq
    %v193 = vshrl.u32 %v192, 7
    %v194 = vsub.s32 0, %v193
    %v195 = vrot.slane %v190, %v194
    %v213 = vunpack.c.l.b16 %v174
    %v214 = vunpack.c.l.b16 %v175
    %v215 = vunpack.c.l.b16 %v176
    %v216 = vunpack.c.l.b16 %v177
    %v217 = vunpack.c.l.b16 %v178
    %v218 = vunpack.c.l.b16 %v179
    %v219 = vunpack.c.l.b16 %v180
    %v220 = vunpack.c.l.b16 %v181
    %v221 = vunpack.c.l.b16 %v182
    %v222 = vunpack.c.l.b16 %v183
    %v223 = vunpack.c.l.b16 %v184
    %v224 = vunpack.c.l.b16 %v185
    %v225 = vunpack.c.l.b16 %v186
    %v226 = vunpack.c.l.b16 %v187
    %v227 = vunpack.c.l.b16 %v188
    %v228 = vunpack.c.l.b16 %v189
    %v229 = vpack.c.b16 %v214, %v213
    %v230 = vpack.c.b16 %v216, %v215
    %v231 = vpack.c.b16 %v218, %v217
    %v232 = vpack.c.b16 %v220, %v219
    %v233 = vpack.c.b16 %v222, %v221
    %v234 = vpack.c.b16 %v224, %v223
    %v235 = vpack.c.b16 %v226, %v225
    %v236 = vpack.c.b16 %v228, %v227
    %245 = vmatprep.subr.bf16.mxu0 0
    %246 = vmatpush1.bf16.xpose.msra.mxu0 %v236
    %247 = vmatprep.subr.bf16.mxu0 0
    %248 = vmatpush1.bf16.xpose.msra.mxu0 %v235
    %249 = vmatprep.subr.bf16.mxu0 0
    %250 = vmatpush1.bf16.xpose.msra.mxu0 %v234
    %251 = vmatprep.subr.bf16.mxu0 0
    %252 = vmatpush1.bf16.xpose.msra.mxu0 %v233
    %253 = vmatprep.subr.bf16.mxu0 0
    %254 = vmatpush1.bf16.xpose.msra.mxu0 %v232
    %255 = vmatprep.subr.bf16.mxu0 0
    %256 = vmatpush1.bf16.xpose.msra.mxu0 %v231
    %257 = vmatprep.subr.bf16.mxu0 0
    %258 = vmatpush1.bf16.xpose.msra.mxu0 %v230
    %259 = vmatprep.subr.bf16.mxu0 0
    %260 = vmatpush1.bf16.xpose.msra.mxu0 %v229
    %261 = vmatprep.subr.bf16.mxu0 0
    %262 = vmatpush2.bf16.xpose.msra.mxu0 0
    %263 = vmatprep.subr.bf16.mxu0 0
    %264 = vmatpush2.bf16.xpose.msra.mxu0 0
    %265 = vmatprep.subr.bf16.mxu0 0
    %266 = vmatpush2.bf16.xpose.msra.mxu0 0
    %267 = vmatprep.subr.bf16.mxu0 0
    %268 = vmatpush2.bf16.xpose.msra.mxu0 0
    %269 = vmatprep.subr.bf16.mxu0 0
    %270 = vmatpush2.bf16.xpose.msra.mxu0 0
    %271 = vmatprep.subr.bf16.mxu0 0
    %272 = vmatpush2.bf16.xpose.msra.mxu0 0
    %273 = vmatprep.subr.bf16.mxu0 0
    %274 = vmatpush2.bf16.xpose.msra.mxu0 0
    %275 = vmatprep.subr.bf16.mxu0 0
    %276 = vmatpush2.bf16.xpose.msra.mxu0 0
    %277 = vmatprep.mubr.bf16.mxu0 0
    %278 = vmatmul.mubr.bf16.gmra.mxu0 %v173
    %v279 = vpop.f32.mrf.mxu0
    %v280 = vadd.f32 %v195, %v279
    %v281 = vpop.f32.mrf.mxu0
    %v282 = vpop.f32.mrf.mxu0
    %v283 = vpop.f32.mrf.mxu0
    %284 = vdwg.mxu0
    %285 = vmax.xlane.f32.xlu0 %v280
    %v286 = vpop.xlane.xlu0 %285
    %v287 = vsub.f32 %v280, %v286
    %v288 = vmul.f32 %v287, 1.442695
    %v289 = vpow.pop %v288
    %290 = vadd.xlane.f32.xlu0 %v289
    %v291 = vpop.xlane.xlu0 %290
    %v292 = vrcp.pop %v291
    %v293 = vmul.f32 %v289, %v292
    %294 = vst [vmem:[#allocation8] sm:$0xff] %v293
    // Predicated region
    $region34: #{tpu_custom_call.1} parent=1 // pred_check
      _
    $region35: #{tpu_custom_call.1} parent=1 // pred_check_branch
      %296 = sbr.rel (0) target = $region37
    $region36: #{tpu_custom_call.1} parent=1 // pred_region
      %s298 = ssub.s32 128, 128
      %299 = vsyncadd [#allocation4], %s298
      %s301 = sshll.u32 [#allocation8], 4
      %s302 = int_to_ptr.vmem [resolvable:$true] %s301
      %304 = dma.vmem_to_hbm [thread:$0]  %s302, 128, %s5, [#allocation4]
    $region37: #{tpu_custom_call.1} parent=1 // pred_fallthru
      _
    // Predicated region
    $region38: #{tpu_custom_call.1} parent=1 // pred_check
      _
    $region39: #{tpu_custom_call.1} parent=1 // pred_check_branch
      %306 = sbr.rel (0) target = $region41
    $region40: #{tpu_custom_call.1} parent=1 // pred_region
      %307 = dma.done [#allocation4], 128
    $region41: #{tpu_custom_call.1} parent=1 // pred_fallthru
      _
    %308 = vsyncpa [#allocation3], 1
    %309 = vsyncpa [#allocation6], 1
    %310 = vsyncpa [#allocation4], 1

</llo_original>
